<compile_context>
chip_gen: v7x
topology: tpu7x:2x2x1
jax: 0.10.0
libtpu: 0.0.40
codegen_flags: <defaults>
</compile_context>

<pallas_src>
import math
from functools import partial

import jax
import jax.numpy as jnp
from jax.experimental import pallas as pl
from jax.experimental.pallas import tpu as pltpu


def _attention_kernel(x_ref, wqkv_ref, wo_ref, bqkv_ref, bo_ref, o_ref,
                      *, batch, seq, embed):
    B, L, E = batch, seq, embed

    # Fused in-projection with B folded into M: (B*L, E) @ (E, 3E) + (1, 3E).
    x = x_ref[...].astype(jnp.float32)                                # (B*L, E)
    wqkv = wqkv_ref[...].astype(jnp.float32)                          # (E, 3E)
    qkv = jnp.dot(x, wqkv,
                  preferred_element_type=jnp.float32) + bqkv_ref[...]  # (B*L, 3E)

    # Static, 128-aligned splits (E = 256 -> lane-tile aligned).  The
    # 1/sqrt(E) scale is already folded into the Wq columns / bq slice.
    q = qkv[:, :E].reshape(B, L, E)
    k = qkv[:, E:2 * E].reshape(B, L, E)
    v = qkv[:, 2 * E:].reshape(B, L, E)

    # Batched scaled-dot-product attention (num_heads = 1 -> head_dim = E).
    s = jnp.einsum("bqd,bkd->bqk", q, k,
                   preferred_element_type=jnp.float32)                # (B, L, L)
    m = jnp.max(s, axis=-1, keepdims=True)
    p = jnp.exp(s - m)
    p = p / jnp.sum(p, axis=-1, keepdims=True)
    ctx = jnp.einsum("bqk,bkd->bqd", p, v,
                     preferred_element_type=jnp.float32)              # (B, L, E)

    # Output projection, again with B folded into M.
    wo = wo_ref[...].astype(jnp.float32)                              # (E, E)
    out = jnp.dot(ctx.reshape(B * L, E), wo,
                  preferred_element_type=jnp.float32) + bo_ref[...]   # (B*L, E)
    o_ref[...] = out.astype(o_ref.dtype)


def attention_forward(x, params):
    """x: (B, L, E) float32.  Returns (B, L*E) like the PyTorch module."""
    B, L, E = x.shape
    wqkv_t, wo_t, bqkv, bo = params

    # Advisory cost estimate for XLA's scheduler.
    flops = (2 * (B * L) * E * (3 * E)      # fused QKV projection
             + B * 2 * L * L * E            # q @ k^T
             + B * 2 * L * L * E            # p @ v
             + 2 * (B * L) * E * E)         # output projection
    transcendentals = B * L * L             # exp in softmax
    bytes_accessed = (4 * B * L * E * 2                 # x in + out (f32)
                      + 2 * (3 * E * E + E * E)         # bf16 weights
                      + 4 * (3 * E + E))                # f32 biases
    cost = pl.CostEstimate(flops=flops,
                           transcendentals=transcendentals,
                           bytes_accessed=bytes_accessed)

    kernel = partial(_attention_kernel, batch=B, seq=L, embed=E)

    # Single grid-less invocation: whole (tiny) problem lives in VMEM, weights
    # are DMA'd exactly once, no per-step pipeline overhead.
    out = pl.pallas_call(
        kernel,
        out_shape=jax.ShapeDtypeStruct((B * L, E), x.dtype),
        cost_estimate=cost,
    )(x.reshape(B * L, E), wqkv_t, wo_t, bqkv, bo)

    # Flatten: x.reshape(x.shape[0], -1) -> (B, L*E); free metadata reshape.
    return out.reshape(B, L * E)


def init_params(key, embed_dim):
    """Deterministic init mimicking nn.MultiheadAttention parameter shapes."""
    E = embed_dim
    k1, k2 = jax.random.split(key, 2)
    # in_proj_weight: (3E, E) xavier_uniform_ (fan_in=E, fan_out=3E);
    # out_proj.weight: (E, E).
    bound_in = math.sqrt(6.0 / (E + 3 * E))
    in_proj_weight = jax.random.uniform(k1, (3 * E, E), jnp.float32,
                                        -bound_in, bound_in)
    bound_out = math.sqrt(6.0 / (E + E))
    out_proj_weight = jax.random.uniform(k2, (E, E), jnp.float32,
                                         -bound_out, bound_out)
    # in_proj_bias and out_proj.bias are zero-initialized in PyTorch.
    bqkv = jnp.zeros((1, 3 * E), jnp.float32)
    bo = jnp.zeros((1, E), jnp.float32)

    # Pre-transpose / fuse so the kernel does x @ [Wq|Wk|Wv]^T in one matmul,
    # and fold the 1/sqrt(head_dim) attention scale into the Wq columns / bq.
    scale = 1.0 / math.sqrt(E)
    wqkv_t = in_proj_weight.T                          # (E, 3E)
    wqkv_t = wqkv_t.at[:, :E].multiply(scale)
    bqkv = bqkv.at[:, :E].multiply(scale)

    # bf16 weight storage halves the dominant HBM DMA; compute stays f32
    # (weights are upcast identically in the kernel and the reference).
    return (wqkv_t.astype(jnp.bfloat16),
            out_proj_weight.T.astype(jnp.bfloat16),
            bqkv, bo)


def _reference(x, params):
    """Pure-JAX reference of the PyTorch forward, for a silent sanity check."""
    wqkv_t, wo_t, bqkv, bo = params
    E = x.shape[-1]
    qkv = x @ wqkv_t.astype(jnp.float32) + bqkv
    q, k, v = qkv[..., :E], qkv[..., E:2 * E], qkv[..., 2 * E:]
    # 1/sqrt(E) already folded into the Wq columns / bq slice.
    s = jnp.einsum("bld,bmd->blm", q, k)
    p = jax.nn.softmax(s, axis=-1)
    ctx = jnp.einsum("blm,bmd->bld", p, v)
    out = ctx @ wo_t.astype(jnp.float32) + bo
    return out.reshape(x.shape[0], -1)


if __name__ == "__main__":
    EMBED_DIM = 256   # module default
    B, L = 2, 8

    key = jax.random.PRNGKey(0)
    kx, kp = jax.random.split(key)
    x = jax.random.normal(kx, (B, L, EMBED_DIM), jnp.float32)
    params = init_params(kp, EMBED_DIM)

    out = attention_forward(x, params)
    out = jax.block_until_ready(out)

    ref = _reference(x, params)
    assert out.shape == (B, L * EMBED_DIM)
    assert jnp.allclose(out, ref, atol=1e-4, rtol=1e-4)

    print("KERNEL_OK")
</pallas_src>

<mosaic_0001>
module attributes {stable_mosaic.version = 11 : i64} {
  func.func @_attention_kernel(%arg0: memref<16x256xf32, #tpu.memory_space<vmem>>, %arg1: memref<256x768xbf16, #tpu.memory_space<vmem>>, %arg2: memref<256x256xbf16, #tpu.memory_space<vmem>>, %arg3: memref<1x768xf32, #tpu.memory_space<vmem>>, %arg4: memref<1x256xf32, #tpu.memory_space<vmem>>, %arg5: memref<16x256xf32, #tpu.memory_space<vmem>>) attributes {dimension_semantics = [], scalar_prefetch = 0 : i64, scratch_operands = 0 : i64, tpu.core_type = #tpu.core_type<tc>} {
    %c0 = arith.constant 0 : index
    %c0_0 = arith.constant 0 : index
    %0 = vector.load %arg0[%c0, %c0_0] : memref<16x256xf32, #tpu.memory_space<vmem>>, vector<16x256xf32>
    %c0_1 = arith.constant 0 : index
    %c0_2 = arith.constant 0 : index
    %1 = vector.load %arg1[%c0_1, %c0_2] : memref<256x768xbf16, #tpu.memory_space<vmem>>, vector<256x768xbf16>
    %2 = arith.extf %1 : vector<256x768xbf16> to vector<256x768xf32>
    %cst = arith.constant dense<0.000000e+00> : vector<16x768xf32>
    %3 = tpu.matmul %0, %2, %cst {dimension_numbers = #tpu.dot_dimension_numbers<[1], [0], [0], [1], [0, 0, 1, 1], [], []>} : vector<16x256xf32>, vector<256x768xf32>, vector<16x768xf32> -> vector<16x768xf32>
    %c0_3 = arith.constant 0 : index
    %c0_4 = arith.constant 0 : index
    %4 = vector.load %arg3[%c0_3, %c0_4] : memref<1x768xf32, #tpu.memory_space<vmem>>, vector<1x768xf32>
    %5 = vector.broadcast %4 : vector<1x768xf32> to vector<16x768xf32>
    %6 = arith.addf %3, %5 : vector<16x768xf32>
    %7 = vector.extract_strided_slice %6 {offsets = [0, 0], sizes = [16, 256], strides = [1, 1]} : vector<16x768xf32> to vector<16x256xf32>
    %8 = vector.shape_cast %7 : vector<16x256xf32> to vector<2x8x256xf32>
    %9 = vector.extract_strided_slice %6 {offsets = [0, 256], sizes = [16, 256], strides = [1, 1]} : vector<16x768xf32> to vector<16x256xf32>
    %10 = vector.shape_cast %9 : vector<16x256xf32> to vector<2x8x256xf32>
    %11 = vector.extract_strided_slice %6 {offsets = [0, 512], sizes = [16, 256], strides = [1, 1]} : vector<16x768xf32> to vector<16x256xf32>
    %12 = vector.shape_cast %11 : vector<16x256xf32> to vector<2x8x256xf32>
    "tpu.trace_start"() <{level = 10 : i32, message = "bqd,bkd->bqk"}> : () -> ()
    %cst_5 = arith.constant dense<0.000000e+00> : vector<2x8x8xf32>
    %13 = tpu.matmul %8, %10, %cst_5 {dimension_numbers = #tpu.dot_dimension_numbers<[2], [2], [1], [1], [0, 0, 0, 1, 1, 1], [0], [0]>} : vector<2x8x256xf32>, vector<2x8x256xf32>, vector<2x8x8xf32> -> vector<2x8x8xf32>
    "tpu.trace_stop"() : () -> ()
    %cst_6 = arith.constant dense<0xFF800000> : vector<2x8xf32>
    %14 = vector.multi_reduction <maximumf>, %13, %cst_6 [2] : vector<2x8x8xf32> to vector<2x8xf32>
    %15 = vector.shape_cast %14 : vector<2x8xf32> to vector<2x8x1xf32>
    %16 = vector.broadcast %15 : vector<2x8x1xf32> to vector<2x8x8xf32>
    %17 = arith.subf %13, %16 : vector<2x8x8xf32>
    %18 = math.exp %17 : vector<2x8x8xf32>
    %cst_7 = arith.constant dense<0.000000e+00> : vector<2x8xf32>
    %19 = vector.multi_reduction <add>, %18, %cst_7 [2] : vector<2x8x8xf32> to vector<2x8xf32>
    %20 = vector.shape_cast %19 : vector<2x8xf32> to vector<2x8x1xf32>
    %21 = vector.broadcast %20 : vector<2x8x1xf32> to vector<2x8x8xf32>
    %22 = arith.divf %18, %21 : vector<2x8x8xf32>
    "tpu.trace_start"() <{level = 10 : i32, message = "bqk,bkd->bqd"}> : () -> ()
    %cst_8 = arith.constant dense<0.000000e+00> : vector<2x8x256xf32>
    %23 = tpu.matmul %22, %12, %cst_8 {dimension_numbers = #tpu.dot_dimension_numbers<[2], [1], [1], [2], [0, 0, 0, 1, 1, 2], [0], [0]>} : vector<2x8x8xf32>, vector<2x8x256xf32>, vector<2x8x256xf32> -> vector<2x8x256xf32>
    "tpu.trace_stop"() : () -> ()
    %c0_9 = arith.constant 0 : index
    %c0_10 = arith.constant 0 : index
    %24 = vector.load %arg2[%c0_9, %c0_10] : memref<256x256xbf16, #tpu.memory_space<vmem>>, vector<256x256xbf16>
    %25 = arith.extf %24 : vector<256x256xbf16> to vector<256x256xf32>
    %26 = vector.shape_cast %23 : vector<2x8x256xf32> to vector<16x256xf32>
    %cst_11 = arith.constant dense<0.000000e+00> : vector<16x256xf32>
    %27 = tpu.matmul %26, %25, %cst_11 {dimension_numbers = #tpu.dot_dimension_numbers<[1], [0], [0], [1], [0, 0, 1, 1], [], []>} : vector<16x256xf32>, vector<256x256xf32>, vector<16x256xf32> -> vector<16x256xf32>
    %c0_12 = arith.constant 0 : index
    %c0_13 = arith.constant 0 : index
    %28 = vector.load %arg4[%c0_12, %c0_13] : memref<1x256xf32, #tpu.memory_space<vmem>>, vector<1x256xf32>
    %29 = vector.broadcast %28 : vector<1x256xf32> to vector<16x256xf32>
    %30 = arith.addf %27, %29 : vector<16x256xf32>
    %c0_14 = arith.constant 0 : index
    %c0_15 = arith.constant 0 : index
    %31 = vector.load %arg5[%c0_14, %c0_15] : memref<16x256xf32, #tpu.memory_space<vmem>>, vector<16x256xf32>
    tpu.vector_store %arg5[%c0_14, %c0_15], %30 {strides = array<i32>} : memref<16x256xf32, #tpu.memory_space<vmem>>, vector<16x256xf32>,
    return
  }
}

</mosaic_0001>

<llo_original>
// kernel: tpu_custom_call.1
$region0: #{tpu_custom_call.1}
  #allocation0 [shape = 'u32[]', space=smem, size = 0x4, offset = 0x4, fixed_abs, tag = 'smem constant byte address 0x4 - core index']
  #allocation1 [shape = 'u32[144,128]{1,0:T(1,128)}', space=vmem, size = 0x12000, scoped, tag = 'internal scratch']
  %s0 = inlined_call_operand.hbm [shape: f32[16,256], index: 0, kind: input, shape index: {}]
  %s1 = inlined_call_operand.hbm [shape: bf16[256,768], index: 1, kind: input, shape index: {}]
  %s2 = inlined_call_operand.hbm [shape: bf16[256,256], index: 2, kind: input, shape index: {}]
  %s3 = inlined_call_operand.vmem [shape: f32[1,768], index: 3, kind: input, shape index: {}]
  %s4 = inlined_call_operand.vmem [shape: f32[1,256], index: 4, kind: input, shape index: {}]
  %s5 = inlined_call_operand.hbm [shape: f32[16,256], index: 5, kind: output, shape index: {}]
  %s6 = sld [smem:[#allocation0]]
  $region42: #{tpu_custom_call.1} parent=0
    _
  %s8 = ssub.s32 1, %s6
  %s9 = scalar_select 0, %s8, %s6
  $region1: #{tpu_custom_call.1} parent=0
    #allocation2 [shape = 'u8[16384]{0}', space=vmem, size = 0x4000, scoped, tag = 'input window, operand 0, single buffered']
    #allocation3 [shape = 's32[1]{0}', space=sflag, size = 0x4, scoped, tag = 'scoped memory for tpu_custom_call.1']
    #allocation4 [shape = 's32[1]{0}', space=sflag, size = 0x4, scoped, tag = 'scoped memory for tpu_custom_call.1']
    #allocation5 [shape = 'u8[393216]{0}', space=vmem, size = 0x60000, scoped, tag = 'input window, operand 1, single buffered']
    #allocation6 [shape = 's32[1]{0}', space=sflag, size = 0x4, scoped, tag = 'scoped memory for tpu_custom_call.1']
    #allocation7 [shape = 'u8[131072]{0}', space=vmem, size = 0x20000, scoped, tag = 'input window, operand 2, single buffered']
    #allocation8 [shape = 'u8[16384]{0}', space=vmem, size = 0x4000, scoped, tag = 'output window, operand 0, single buffered']
    %10 = vsyncpa [#allocation3], 0
    %11 = vsyncpa [#allocation6], 0
    %12 = vsyncpa [#allocation4], 0
    // Predicated region
    $region2: #{tpu_custom_call.1} parent=1 // pred_check
      _
    $region3: #{tpu_custom_call.1} parent=1 // pred_check_branch
      %14 = sbr.rel (0) target = $region5
    $region4: #{tpu_custom_call.1} parent=1 // pred_region
      %s16 = ssub.s32 512, 512
      %17 = vsyncadd [#allocation3], %s16
      %s18 = sshll.u32 [#allocation2], 4
      %s19 = int_to_ptr.vmem [resolvable:$true] %s18
      %24 = dma.hbm_to_vmem [thread:$0]  %s0, 512, %s19, [#allocation3], 256, 256, 16
    $region5: #{tpu_custom_call.1} parent=1 // pred_fallthru
      _
    // Predicated region
    $region6: #{tpu_custom_call.1} parent=1 // pred_check
      _
    $region7: #{tpu_custom_call.1} parent=1 // pred_check_branch
      %26 = sbr.rel (0) target = $region9
    $region8: #{tpu_custom_call.1} parent=1 // pred_region
      %s28 = ssub.s32 12288, 12288
      %29 = vsyncadd [#allocation6], %s28
      %s30 = sshll.u32 [#allocation5], 4
      %s31 = int_to_ptr.vmem [resolvable:$true] %s30
      %36 = dma.hbm_to_vmem [thread:$0]  %s1, 12288, %s31, [#allocation6], 384, 384, 24
    $region9: #{tpu_custom_call.1} parent=1 // pred_fallthru
      _
    // Predicated region
    $region10: #{tpu_custom_call.1} parent=1 // pred_check
      _
    $region11: #{tpu_custom_call.1} parent=1 // pred_check_branch
      %38 = sbr.rel (0) target = $region13
    $region12: #{tpu_custom_call.1} parent=1 // pred_region
      %s40 = ssub.s32 4096, 4096
      %41 = vsyncadd [#allocation6], %s40
      %s42 = sshll.u32 [#allocation7], 4
      %s43 = int_to_ptr.vmem [resolvable:$true] %s42
      %48 = dma.hbm_to_vmem [thread:$0]  %s2, 4096, %s43, [#allocation6], 128, 128, 8
    $region13: #{tpu_custom_call.1} parent=1 // pred_fallthru
      _
    // Predicated region
    $region14: #{tpu_custom_call.1} parent=1 // pred_check
      _
    $region15: #{tpu_custom_call.1} parent=1 // pred_check_branch
      %50 = sbr.rel (0) target = $region17
    $region16: #{tpu_custom_call.1} parent=1 // pred_region
      _
    $region17: #{tpu_custom_call.1} parent=1 // pred_fallthru
      _
    // Predicated region
    $region18: #{tpu_custom_call.1} parent=1 // pred_check
      _
    $region19: #{tpu_custom_call.1} parent=1 // pred_check_branch
      %52 = sbr.rel (0) target = $region21
    $region20: #{tpu_custom_call.1} parent=1 // pred_region
      _
    $region21: #{tpu_custom_call.1} parent=1 // pred_fallthru
      _
    // Predicated region
    $region22: #{tpu_custom_call.1} parent=1 // pred_check
      _
    $region23: #{tpu_custom_call.1} parent=1 // pred_check_branch
      %54 = sbr.rel (0) target = $region25
    $region24: #{tpu_custom_call.1} parent=1 // pred_region
      %55 = dma.done [#allocation3], 512
    $region25: #{tpu_custom_call.1} parent=1 // pred_fallthru
      _
    // Predicated region
    $region26: #{tpu_custom_call.1} parent=1 // pred_check
      _
    $region27: #{tpu_custom_call.1} parent=1 // pred_check_branch
      %57 = sbr.rel (0) target = $region29
    $region28: #{tpu_custom_call.1} parent=1 // pred_region
      %58 = dma.done [#allocation6], 12288
    $region29: #{tpu_custom_call.1} parent=1 // pred_fallthru
      _
    // Predicated region
    $region30: #{tpu_custom_call.1} parent=1 // pred_check
      _
    $region31: #{tpu_custom_call.1} parent=1 // pred_check_branch
      %60 = sbr.rel (0) target = $region33
    $region32: #{tpu_custom_call.1} parent=1 // pred_region
      %61 = dma.done [#allocation6], 4096
    $region33: #{tpu_custom_call.1} parent=1 // pred_fallthru
      _
    %v62 = vld [vmem:[#allocation2] sm:$0xff]
    %v63 = vld [vmem:[#allocation2 + $0x8] sm:$0xff]
    %v64 = vld [vmem:[#allocation2 + $0x10] sm:$0xff]
    %v65 = vld [vmem:[#allocation2 + $0x18] sm:$0xff]
    %v66 = vld [vmem:[#allocation5] sm:$0xff]
    %v67 = vld [vmem:[#allocation5 + $0x8] sm:$0xff]
    %v68 = vld [vmem:[#allocation5 + $0x10] sm:$0xff]
    %v69 = vld [vmem:[#allocation5 + $0x18] sm:$0xff]
    %v70 = vld [vmem:[#allocation5 + $0x20] sm:$0xff]
    %v71 = vld [vmem:[#allocation5 + $0x28] sm:$0xff]
    %v72 = vld [vmem:[#allocation5 + $0x30] sm:$0xff]
    %v73 = vld [vmem:[#allocation5 + $0x38] sm:$0xff]
    %v74 = vld [vmem:[#allocation5 + $0x40] sm:$0xff]
    %v75 = vld [vmem:[#allocation5 + $0x48] sm:$0xff]
    %v76 = vld [vmem:[#allocation5 + $0x50] sm:$0xff]
    %v77 = vld [vmem:[#allocation5 + $0x58] sm:$0xff]
    %v78 = vld [vmem:[#allocation5 + $0x60] sm:$0xff]
    %v79 = vld [vmem:[#allocation5 + $0x68] sm:$0xff]
    %v80 = vld [vmem:[#allocation5 + $0x70] sm:$0xff]
    %v81 = vld [vmem:[#allocation5 + $0x78] sm:$0xff]
    %v82 = vld [vmem:[#allocation5 + $0x80] sm:$0xff]
    %v83 = vld [vmem:[#allocation5 + $0x88] sm:$0xff]
    %v84 = vld [vmem:[#allocation5 + $0x90] sm:$0xff]
    %v85 = vld [vmem:[#allocation5 + $0x98] sm:$0xff]
    %v86 = vld [vmem:[#allocation5 + $0xa0] sm:$0xff]
    %v87 = vld [vmem:[#allocation5 + $0xa8] sm:$0xff]
    %v88 = vld [vmem:[#allocation5 + $0xb0] sm:$0xff]
    %v89 = vld [vmem:[#allocation5 + $0xb8] sm:$0xff]
    %v90 = vld [vmem:[#allocation5 + $0xc0] sm:$0xff]
    %v91 = vld [vmem:[#allocation5 + $0xc8] sm:$0xff]
    %v92 = vld [vmem:[#allocation5 + $0xd0] sm:$0xff]
    %v93 = vld [vmem:[#allocation5 + $0xd8] sm:$0xff]
    %v94 = vld [vmem:[#allocation5 + $0xe0] sm:$0xff]
    %v95 = vld [vmem:[#allocation5 + $0xe8] sm:$0xff]
    %v96 = vld [vmem:[#allocation5 + $0xf0] sm:$0xff]
    %v97 = vld [vmem:[#allocation5 + $0xf8] sm:$0xff]
    %v98 = vld [vmem:[#allocation5 + $0x100] sm:$0xff]
    %v99 = vld [vmem:[#allocation5 + $0x108] sm:$0xff]
    %v100 = vld [vmem:[#allocation5 + $0x110] sm:$0xff]
    %v101 = vld [vmem:[#allocation5 + $0x118] sm:$0xff]
    %v102 = vld [vmem:[#allocation5 + $0x120] sm:$0xff]
    %v103 = vld [vmem:[#allocation5 + $0x128] sm:$0xff]
    %v104 = vld [vmem:[#allocation5 + $0x130] sm:$0xff]
    %v105 = vld [vmem:[#allocation5 + $0x138] sm:$0xff]
    %v106 = vld [vmem:[#allocation5 + $0x140] sm:$0xff]
    %v107 = vld [vmem:[#allocation5 + $0x148] sm:$0xff]
    %v108 = vld [vmem:[#allocation5 + $0x150] sm:$0xff]
    %v109 = vld [vmem:[#allocation5 + $0x158] sm:$0xff]
    %v110 = vld [vmem:[#allocation5 + $0x160] sm:$0xff]
    %v111 = vld [vmem:[#allocation5 + $0x168] sm:$0xff]
    %v112 = vld [vmem:[#allocation5 + $0x170] sm:$0xff]
    %v113 = vld [vmem:[#allocation5 + $0x178] sm:$0xff]
    %v114 = vld [vmem:[#allocation5 + $0x180] sm:$0xff]
    %v115 = vld [vmem:[#allocation5 + $0x188] sm:$0xff]
    %v116 = vld [vmem:[#allocation5 + $0x190] sm:$0xff]
    %v117 = vld [vmem:[#allocation5 + $0x198] sm:$0xff]
    %v118 = vld [vmem:[#allocation5 + $0x1a0] sm:$0xff]
    %v119 = vld [vmem:[#allocation5 + $0x1a8] sm:$0xff]
    %v120 = vld [vmem:[#allocation5 + $0x1b0] sm:$0xff]
    %v121 = vld [vmem:[#allocation5 + $0x1b8] sm:$0xff]
    %v122 = vld [vmem:[#allocation5 + $0x1c0] sm:$0xff]
    %v123 = vld [vmem:[#allocation5 + $0x1c8] sm:$0xff]
    %v124 = vld [vmem:[#allocation5 + $0x1d0] sm:$0xff]
    %v125 = vld [vmem:[#allocation5 + $0x1d8] sm:$0xff]
    %v126 = vld [vmem:[#allocation5 + $0x1e0] sm:$0xff]
    %v127 = vld [vmem:[#allocation5 + $0x1e8] sm:$0xff]
    %v128 = vld [vmem:[#allocation5 + $0x1f0] sm:$0xff]
    %v129 = vld [vmem:[#allocation5 + $0x1f8] sm:$0xff]
    %v130 = vld [vmem:[#allocation5 + $0x200] sm:$0xff]
    %v131 = vld [vmem:[#allocation5 + $0x208] sm:$0xff]
    %v132 = vld [vmem:[#allocation5 + $0x210] sm:$0xff]
    %v133 = vld [vmem:[#allocation5 + $0x218] sm:$0xff]
    %v134 = vld [vmem:[#allocation5 + $0x220] sm:$0xff]
    %v135 = vld [vmem:[#allocation5 + $0x228] sm:$0xff]
    %v136 = vld [vmem:[#allocation5 + $0x230] sm:$0xff]
    %v137 = vld [vmem:[#allocation5 + $0x238] sm:$0xff]
    %v138 = vld [vmem:[#allocation5 + $0x240] sm:$0xff]
    %v139 = vld [vmem:[#allocation5 + $0x248] sm:$0xff]
    %v140 = vld [vmem:[#allocation5 + $0x250] sm:$0xff]
    %v141 = vld [vmem:[#allocation5 + $0x258] sm:$0xff]
    %v142 = vld [vmem:[#allocation5 + $0x260] sm:$0xff]
    %v143 = vld [vmem:[#allocation5 + $0x268] sm:$0xff]
    %v144 = vld [vmem:[#allocation5 + $0x270] sm:$0xff]
    %v145 = vld [vmem:[#allocation5 + $0x278] sm:$0xff]
    %v146 = vld [vmem:[#allocation5 + $0x280] sm:$0xff]
    %v147 = vld [vmem:[#allocation5 + $0x288] sm:$0xff]
    %v148 = vld [vmem:[#allocation5 + $0x290] sm:$0xff]
    %v149 = vld [vmem:[#allocation5 + $0x298] sm:$0xff]
    %v150 = vld [vmem:[#allocation5 + $0x2a0] sm:$0xff]
    %v151 = vld [vmem:[#allocation5 + $0x2a8] sm:$0xff]
    %v152 = vld [vmem:[#allocation5 + $0x2b0] sm:$0xff]
    %v153 = vld [vmem:[#allocation5 + $0x2b8] sm:$0xff]
    %v154 = vld [vmem:[#allocation5 + $0x2c0] sm:$0xff]
    %v155 = vld [vmem:[#allocation5 + $0x2c8] sm:$0xff]
    %v156 = vld [vmem:[#allocation5 + $0x2d0] sm:$0xff]
    %v157 = vld [vmem:[#allocation5 + $0x2d8] sm:$0xff]
    %v158 = vld [vmem:[#allocation5 + $0x2e0] sm:$0xff]
    %v159 = vld [vmem:[#allocation5 + $0x2e8] sm:$0xff]
    %v160 = vld [vmem:[#allocation5 + $0x2f0] sm:$0xff]
    %v161 = vld [vmem:[#allocation5 + $0x2f8] sm:$0xff]
    %v162 = vunpack.c.l.bf16 %v66
    %v163 = vunpack.c.h.bf16 %v66
    %v164 = vunpack.c.l.bf16 %v67
    %v165 = vunpack.c.h.bf16 %v67
    %v166 = vunpack.c.l.bf16 %v68
    %v167 = vunpack.c.h.bf16 %v68
    %v168 = vunpack.c.l.bf16 %v69
    %v169 = vunpack.c.h.bf16 %v69
    %v170 = vunpack.c.l.bf16 %v70
    %v171 = vunpack.c.h.bf16 %v70
    %v172 = vunpack.c.l.bf16 %v71
    %v173 = vunpack.c.h.bf16 %v71
    %v174 = vunpack.c.l.bf16 %v72
    %v175 = vunpack.c.h.bf16 %v72
    %v176 = vunpack.c.l.bf16 %v73
    %v177 = vunpack.c.h.bf16 %v73
    %v178 = vunpack.c.l.bf16 %v74
    %v179 = vunpack.c.h.bf16 %v74
    %v180 = vunpack.c.l.bf16 %v75
    %v181 = vunpack.c.h.bf16 %v75
    %v182 = vunpack.c.l.bf16 %v76
    %v183 = vunpack.c.h.bf16 %v76
    %v184 = vunpack.c.l.bf16 %v77
    %v185 = vunpack.c.h.bf16 %v77
    %v186 = vunpack.c.l.bf16 %v78
    %v187 = vunpack.c.h.bf16 %v78
    %v188 = vunpack.c.l.bf16 %v79
    %v189 = vunpack.c.h.bf16 %v79
    %v190 = vunpack.c.l.bf16 %v80
    %v191 = vunpack.c.h.bf16 %v80
    %v192 = vunpack.c.l.bf16 %v81
    %v193 = vunpack.c.h.bf16 %v81
    %v194 = vunpack.c.l.bf16 %v82
    %v195 = vunpack.c.h.bf16 %v82
    %v196 = vunpack.c.l.bf16 %v83
    %v197 = vunpack.c.h.bf16 %v83
    %v198 = vunpack.c.l.bf16 %v84
    %v199 = vunpack.c.h.bf16 %v84
    %v200 = vunpack.c.l.bf16 %v85
    %v201 = vunpack.c.h.bf16 %v85
    %v202 = vunpack.c.l.bf16 %v86
    %v203 = vunpack.c.h.bf16 %v86
    %v204 = vunpack.c.l.bf16 %v87
    %v205 = vunpack.c.h.bf16 %v87
    %v206 = vunpack.c.l.bf16 %v88
    %v207 = vunpack.c.h.bf16 %v88
    %v208 = vunpack.c.l.bf16 %v89
    %v209 = vunpack.c.h.bf16 %v89
    %v210 = vunpack.c.l.bf16 %v90
    %v211 = vunpack.c.h.bf16 %v90
    %v212 = vunpack.c.l.bf16 %v91
    %v213 = vunpack.c.h.bf16 %v91
    %v214 = vunpack.c.l.bf16 %v92
    %v215 = vunpack.c.h.bf16 %v92
    %v216 = vunpack.c.l.bf16 %v93
    %v217 = vunpack.c.h.bf16 %v93
    %v218 = vunpack.c.l.bf16 %v94
    %v219 = vunpack.c.h.bf16 %v94
    %v220 = vunpack.c.l.bf16 %v95
    %v221 = vunpack.c.h.bf16 %v95
    %v222 = vunpack.c.l.bf16 %v96
    %v223 = vunpack.c.h.bf16 %v96
    %v224 = vunpack.c.l.bf16 %v97
    %v225 = vunpack.c.h.bf16 %v97
    %v226 = vunpack.c.l.bf16 %v98
    %v227 = vunpack.c.h.bf16 %v98
    %v228 = vunpack.c.l.bf16 %v99
    %v229 = vunpack.c.h.bf16 %v99
    %v230 = vunpack.c.l.bf16 %v100
    %v231 = vunpack.c.h.bf16 %v100
    %v232 = vunpack.c.l.bf16 %v101
    %v233 = vunpack.c.h.bf16 %v101
    %v234 = vunpack.c.l.bf16 %v102
    %v235 = vunpack.c.h.bf16 %v102
    %v236 = vunpack.c.l.bf16 %v103
    %v237 = vunpack.c.h.bf16 %v103
    %v238 = vunpack.c.l.bf16 %v104
    %v239 = vunpack.c.h.bf16 %v104
    %v240 = vunpack.c.l.bf16 %v105
    %v241 = vunpack.c.h.bf16 %v105
    %v242 = vunpack.c.l.bf16 %v106
    %v243 = vunpack.c.h.bf16 %v106
    %v244 = vunpack.c.l.bf16 %v107
    %v245 = vunpack.c.h.bf16 %v107
    %v246 = vunpack.c.l.bf16 %v108
    %v247 = vunpack.c.h.bf16 %v108
    %v248 = vunpack.c.l.bf16 %v109
    %v249 = vunpack.c.h.bf16 %v109
    %v250 = vunpack.c.l.bf16 %v110
    %v251 = vunpack.c.h.bf16 %v110
    %v252 = vunpack.c.l.bf16 %v111
    %v253 = vunpack.c.h.bf16 %v111
    %v254 = vunpack.c.l.bf16 %v112
    %v255 = vunpack.c.h.bf16 %v112
    %v256 = vunpack.c.l.bf16 %v113
    %v257 = vunpack.c.h.bf16 %v113
    %v258 = vunpack.c.l.bf16 %v114
    %v259 = vunpack.c.h.bf16 %v114
    %v260 = vunpack.c.l.bf16 %v115
    %v261 = vunpack.c.h.bf16 %v115
    %v262 = vunpack.c.l.bf16 %v116
    %v263 = vunpack.c.h.bf16 %v116
    %v264 = vunpack.c.l.bf16 %v117
    %v265 = vunpack.c.h.bf16 %v117
    %v266 = vunpack.c.l.bf16 %v118
    %v267 = vunpack.c.h.bf16 %v118
    %v268 = vunpack.c.l.bf16 %v119
    %v269 = vunpack.c.h.bf16 %v119
    %v270 = vunpack.c.l.bf16 %v120
    %v271 = vunpack.c.h.bf16 %v120
    %v272 = vunpack.c.l.bf16 %v121
    %v273 = vunpack.c.h.bf16 %v121
    %v274 = vunpack.c.l.bf16 %v122
    %v275 = vunpack.c.h.bf16 %v122
    %v276 = vunpack.c.l.bf16 %v123
    %v277 = vunpack.c.h.bf16 %v123
    %v278 = vunpack.c.l.bf16 %v124
    %v279 = vunpack.c.h.bf16 %v124
    %v280 = vunpack.c.l.bf16 %v125
    %v281 = vunpack.c.h.bf16 %v125
    %v282 = vunpack.c.l.bf16 %v126
    %v283 = vunpack.c.h.bf16 %v126
    %v284 = vunpack.c.l.bf16 %v127
    %v285 = vunpack.c.h.bf16 %v127
    %v286 = vunpack.c.l.bf16 %v128
    %v287 = vunpack.c.h.bf16 %v128
    %v288 = vunpack.c.l.bf16 %v129
    %v289 = vunpack.c.h.bf16 %v129
    %v290 = vunpack.c.l.bf16 %v130
    %v291 = vunpack.c.h.bf16 %v130
    %v292 = vunpack.c.l.bf16 %v131
    %v293 = vunpack.c.h.bf16 %v131
    %v294 = vunpack.c.l.bf16 %v132
    %v295 = vunpack.c.h.bf16 %v132
    %v296 = vunpack.c.l.bf16 %v133
    %v297 = vunpack.c.h.bf16 %v133
    %v298 = vunpack.c.l.bf16 %v134
    %v299 = vunpack.c.h.bf16 %v134
    %v300 = vunpack.c.l.bf16 %v135
    %v301 = vunpack.c.h.bf16 %v135
    %v302 = vunpack.c.l.bf16 %v136
    %v303 = vunpack.c.h.bf16 %v136
    %v304 = vunpack.c.l.bf16 %v137
    %v305 = vunpack.c.h.bf16 %v137
    %v306 = vunpack.c.l.bf16 %v138
    %v307 = vunpack.c.h.bf16 %v138
    %v308 = vunpack.c.l.bf16 %v139
    %v309 = vunpack.c.h.bf16 %v139
    %v310 = vunpack.c.l.bf16 %v140
    %v311 = vunpack.c.h.bf16 %v140
    %v312 = vunpack.c.l.bf16 %v141
    %v313 = vunpack.c.h.bf16 %v141
    %v314 = vunpack.c.l.bf16 %v142
    %v315 = vunpack.c.h.bf16 %v142
    %v316 = vunpack.c.l.bf16 %v143
    %v317 = vunpack.c.h.bf16 %v143
    %v318 = vunpack.c.l.bf16 %v144
    %v319 = vunpack.c.h.bf16 %v144
    %v320 = vunpack.c.l.bf16 %v145
    %v321 = vunpack.c.h.bf16 %v145
    %v322 = vunpack.c.l.bf16 %v146
    %v323 = vunpack.c.h.bf16 %v146
    %v324 = vunpack.c.l.bf16 %v147
    %v325 = vunpack.c.h.bf16 %v147
    %v326 = vunpack.c.l.bf16 %v148
    %v327 = vunpack.c.h.bf16 %v148
    %v328 = vunpack.c.l.bf16 %v149
    %v329 = vunpack.c.h.bf16 %v149
    %v330 = vunpack.c.l.bf16 %v150
    %v331 = vunpack.c.h.bf16 %v150
    %v332 = vunpack.c.l.bf16 %v151
    %v333 = vunpack.c.h.bf16 %v151
    %v334 = vunpack.c.l.bf16 %v152
    %v335 = vunpack.c.h.bf16 %v152
    %v336 = vunpack.c.l.bf16 %v153
    %v337 = vunpack.c.h.bf16 %v153
    %v338 = vunpack.c.l.bf16 %v154
    %v339 = vunpack.c.h.bf16 %v154
    %v340 = vunpack.c.l.bf16 %v155
    %v341 = vunpack.c.h.bf16 %v155
    %v342 = vunpack.c.l.bf16 %v156
    %v343 = vunpack.c.h.bf16 %v156
    %v344 = vunpack.c.l.bf16 %v157
    %v345 = vunpack.c.h.bf16 %v157
    %v346 = vunpack.c.l.bf16 %v158
    %v347 = vunpack.c.h.bf16 %v158
    %v348 = vunpack.c.l.bf16 %v159
    %v349 = vunpack.c.h.bf16 %v159
    %v350 = vunpack.c.l.bf16 %v160
    %v351 = vunpack.c.h.bf16 %v160
    %v352 = vunpack.c.l.bf16 %v161
    %v353 = vunpack.c.h.bf16 %v161
    %v354 = vld [vmem:[%s3] sm:$0x3f]
    %v356 = vlaneseq
    %v357 = vshrl.u32 %v356, 7
    %v358 = vsub.s32 0, %v357
    %v359 = vrot.slane %v354, %v358
    %v360 = vlaneseq
    %v361 = vshrl.u32 %v360, 7
    %v362 = vsub.s32 1, %v361
    %v363 = vrot.slane %v354, %v362
    %v364 = vlaneseq
    %v365 = vshrl.u32 %v364, 7
    %v366 = vsub.s32 2, %v365
    %v367 = vrot.slane %v354, %v366
    %v368 = vlaneseq
    %v369 = vshrl.u32 %v368, 7
    %v370 = vsub.s32 3, %v369
    %v371 = vrot.slane %v354, %v370
    %v372 = vlaneseq
    %v373 = vshrl.u32 %v372, 7
    %v374 = vsub.s32 4, %v373
    %v375 = vrot.slane %v354, %v374
    %v376 = vlaneseq
    %v377 = vshrl.u32 %v376, 7
    %v378 = vsub.s32 5, %v377
    %v379 = vrot.slane %v354, %v378
    %386 = vmatprep.subr.mxu0 %v163
    %387 = vmatpush1.msra.mxu0 %v162
    %388 = vmatprep.subr.mxu0 %v169
    %389 = vmatpush1.msra.mxu0 %v168
    %390 = vmatprep.subr.mxu0 %v175
    %391 = vmatpush1.msra.mxu0 %v174
    %392 = vmatprep.subr.mxu0 %v181
    %393 = vmatpush1.msra.mxu0 %v180
    %394 = vmatprep.subr.mxu0 %v187
    %395 = vmatpush1.msra.mxu0 %v186
    %396 = vmatprep.subr.mxu0 %v193
    %397 = vmatpush1.msra.mxu0 %v192
    %398 = vmatprep.subr.mxu0 %v199
    %399 = vmatpush1.msra.mxu0 %v198
    %400 = vmatprep.subr.mxu0 %v205
    %401 = vmatpush1.msra.mxu0 %v204
    %402 = vmatprep.subr.mxu0 %v211
    %403 = vmatpush1.msra.mxu0 %v210
    %404 = vmatprep.subr.mxu0 %v217
    %405 = vmatpush1.msra.mxu0 %v216
    %406 = vmatprep.subr.mxu0 %v223
    %407 = vmatpush1.msra.mxu0 %v222
    %408 = vmatprep.subr.mxu0 %v229
    %409 = vmatpush1.msra.mxu0 %v228
    %410 = vmatprep.subr.mxu0 %v235
    %411 = vmatpush1.msra.mxu0 %v234
    %412 = vmatprep.subr.mxu0 %v241
    %413 = vmatpush1.msra.mxu0 %v240
    %414 = vmatprep.subr.mxu0 %v247
    %415 = vmatpush1.msra.mxu0 %v246
    %416 = vmatprep.subr.mxu0 %v253
    %417 = vmatpush1.msra.mxu0 %v252
    %418 = vmatprep.subr.mxu0 %v259
    %419 = vmatpush1.msra.mxu0 %v258
    %420 = vmatprep.subr.mxu0 %v265
    %421 = vmatpush1.msra.mxu0 %v264
    %422 = vmatprep.subr.mxu0 %v271
    %423 = vmatpush1.msra.mxu0 %v270
    %424 = vmatprep.subr.mxu0 %v277
    %425 = vmatpush1.msra.mxu0 %v276
    %426 = vmatprep.subr.mxu0 %v283
    %427 = vmatpush1.msra.mxu0 %v282
    %428 = vmatprep.subr.mxu0 %v289
    %429 = vmatpush1.msra.mxu0 %v288
    %430 = vmatprep.subr.mxu0 %v295
    %431 = vmatpush1.msra.mxu0 %v294
    %432 = vmatprep.subr.mxu0 %v301
    %433 = vmatpush1.msra.mxu0 %v300
    %434 = vmatprep.subr.mxu0 %v307
    %435 = vmatpush1.msra.mxu0 %v306
    %436 = vmatprep.subr.mxu0 %v313
    %437 = vmatpush1.msra.mxu0 %v312
    %438 = vmatprep.subr.mxu0 %v319
    %439 = vmatpush1.msra.mxu0 %v318
    %440 = vmatprep.subr.mxu0 %v325
    %441 = vmatpush1.msra.mxu0 %v324
    %442 = vmatprep.subr.mxu0 %v331
    %443 = vmatpush1.msra.mxu0 %v330
    %444 = vmatprep.subr.mxu0 %v337
    %445 = vmatpush1.msra.mxu0 %v336
    %446 = vmatprep.subr.mxu0 %v343
    %447 = vmatpush1.msra.mxu0 %v342
    %448 = vmatprep.subr.mxu0 %v349
    %449 = vmatpush1.msra.mxu0 %v348
    %450 = vmatprep.mubr.f32.mxu0 %v63
    %451 = vmatmul.mubr.f32.gmra.mrb[0].mxu0 %v62
    %v452 = vpop.f32.mrb[0].mxu0
    %v453 = vadd.f32 %v359, %v452
    %v454 = vpop.f32.mrb[0].mxu0
    %v455 = vadd.f32 %v363, %v454
    %456 = vmatprep.mubr.f32.mxu0 %v65
    %457 = vmatmul.mubr.f32.gmra.mrb[0].mxu0 %v64
    %v458 = vpop.f32.mrb[0].mxu0
    %v459 = vadd.f32 %v359, %v458
    %v460 = vpop.f32.mrb[0].mxu0
    %v461 = vadd.f32 %v363, %v460
    %462 = vdwg.mxu0
    %463 = vmatprep.subr.mxu0 %v165
    %464 = vmatpush1.msra.mxu0 %v164
    %465 = vmatprep.subr.mxu0 %v171
    %466 = vmatpush1.msra.mxu0 %v170
    %467 = vmatprep.subr.mxu0 %v177
    %468 = vmatpush1.msra.mxu0 %v176
    %469 = vmatprep.subr.mxu0 %v183
    %470 = vmatpush1.msra.mxu0 %v182
    %471 = vmatprep.subr.mxu0 %v189
    %472 = vmatpush1.msra.mxu0 %v188
    %473 = vmatprep.subr.mxu0 %v195
    %474 = vmatpush1.msra.mxu0 %v194
    %475 = vmatprep.subr.mxu0 %v201
    %476 = vmatpush1.msra.mxu0 %v200
    %477 = vmatprep.subr.mxu0 %v207
    %478 = vmatpush1.msra.mxu0 %v206
    %479 = vmatprep.subr.mxu0 %v213
    %480 = vmatpush1.msra.mxu0 %v212
    %481 = vmatprep.subr.mxu0 %v219
    %482 = vmatpush1.msra.mxu0 %v218
    %483 = vmatprep.subr.mxu0 %v225
    %484 = vmatpush1.msra.mxu0 %v224
    %485 = vmatprep.subr.mxu0 %v231
    %486 = vmatpush1.msra.mxu0 %v230
    %487 = vmatprep.subr.mxu0 %v237
    %488 = vmatpush1.msra.mxu0 %v236
    %489 = vmatprep.subr.mxu0 %v243
    %490 = vmatpush1.msra.mxu0 %v242
    %491 = vmatprep.subr.mxu0 %v249
    %492 = vmatpush1.msra.mxu0 %v248
    %493 = vmatprep.subr.mxu0 %v255
    %494 = vmatpush1.msra.mxu0 %v254
    %495 = vmatprep.subr.mxu0 %v261
    %496 = vmatpush1.msra.mxu0 %v260
    %497 = vmatprep.subr.mxu0 %v267
    %498 = vmatpush1.msra.mxu0 %v266
    %499 = vmatprep.subr.mxu0 %v273
    %500 = vmatpush1.msra.mxu0 %v272
    %501 = vmatprep.subr.mxu0 %v279
    %502 = vmatpush1.msra.mxu0 %v278
    %503 = vmatprep.subr.mxu0 %v285
    %504 = vmatpush1.msra.mxu0 %v284
    %505 = vmatprep.subr.mxu0 %v291
    %506 = vmatpush1.msra.mxu0 %v290
    %507 = vmatprep.subr.mxu0 %v297
    %508 = vmatpush1.msra.mxu0 %v296
    %509 = vmatprep.subr.mxu0 %v303
    %510 = vmatpush1.msra.mxu0 %v302
    %511 = vmatprep.subr.mxu0 %v309
    %512 = vmatpush1.msra.mxu0 %v308
    %513 = vmatprep.subr.mxu0 %v315
    %514 = vmatpush1.msra.mxu0 %v314
    %515 = vmatprep.subr.mxu0 %v321
    %516 = vmatpush1.msra.mxu0 %v320
    %517 = vmatprep.subr.mxu0 %v327
    %518 = vmatpush1.msra.mxu0 %v326
    %519 = vmatprep.subr.mxu0 %v333
    %520 = vmatpush1.msra.mxu0 %v332
    %521 = vmatprep.subr.mxu0 %v339
    %522 = vmatpush1.msra.mxu0 %v338
    %523 = vmatprep.subr.mxu0 %v345
    %524 = vmatpush1.msra.mxu0 %v344
    %525 = vmatprep.subr.mxu0 %v351
    %526 = vmatpush1.msra.mxu0 %v350
    %527 = vmatprep.mubr.f32.mxu0 %v63
    %528 = vmatmul.mubr.f32.gmra.mrb[0].mxu0 %v62
    %v529 = vpop.f32.mrb[0].mxu0
    %v530 = vadd.f32 %v367, %v529
    %v531 = vpop.f32.mrb[0].mxu0
    %v532 = vadd.f32 %v371, %v531
    %533 = vmatprep.mubr.f32.mxu0 %v65
    %534 = vmatmul.mubr.f32.gmra.mrb[0].mxu0 %v64
    %v535 = vpop.f32.mrb[0].mxu0
    %v536 = vadd.f32 %v367, %v535
    %v537 = vpop.f32.mrb[0].mxu0
    %v538 = vadd.f32 %v371, %v537
    %539 = vdwg.mxu0
    %540 = vmatprep.subr.mxu0 %v167
    %541 = vmatpush1.msra.mxu0 %v166
    %542 = vmatprep.subr.mxu0 %v173
    %543 = vmatpush1.msra.mxu0 %v172
    %544 = vmatprep.subr.mxu0 %v179
    %545 = vmatpush1.msra.mxu0 %v178
    %546 = vmatprep.subr.mxu0 %v185
    %547 = vmatpush1.msra.mxu0 %v184
    %548 = vmatprep.subr.mxu0 %v191
    %549 = vmatpush1.msra.mxu0 %v190
    %550 = vmatprep.subr.mxu0 %v197
    %551 = vmatpush1.msra.mxu0 %v196
    %552 = vmatprep.subr.mxu0 %v203
    %553 = vmatpush1.msra.mxu0 %v202
    %554 = vmatprep.subr.mxu0 %v209
    %555 = vmatpush1.msra.mxu0 %v208
    %556 = vmatprep.subr.mxu0 %v215
    %557 = vmatpush1.msra.mxu0 %v214
    %558 = vmatprep.subr.mxu0 %v221
    %559 = vmatpush1.msra.mxu0 %v220
    %560 = vmatprep.subr.mxu0 %v227
    %561 = vmatpush1.msra.mxu0 %v226
    %562 = vmatprep.subr.mxu0 %v233
    %563 = vmatpush1.msra.mxu0 %v232
    %564 = vmatprep.subr.mxu0 %v239
    %565 = vmatpush1.msra.mxu0 %v238
    %566 = vmatprep.subr.mxu0 %v245
    %567 = vmatpush1.msra.mxu0 %v244
    %568 = vmatprep.subr.mxu0 %v251
    %569 = vmatpush1.msra.mxu0 %v250
    %570 = vmatprep.subr.mxu0 %v257
    %571 = vmatpush1.msra.mxu0 %v256
    %572 = vmatprep.subr.mxu0 %v263
    %573 = vmatpush1.msra.mxu0 %v262
    %574 = vmatprep.subr.mxu0 %v269
    %575 = vmatpush1.msra.mxu0 %v268
    %576 = vmatprep.subr.mxu0 %v275
    %577 = vmatpush1.msra.mxu0 %v274
    %578 = vmatprep.subr.mxu0 %v281
    %579 = vmatpush1.msra.mxu0 %v280
    %580 = vmatprep.subr.mxu0 %v287
    %581 = vmatpush1.msra.mxu0 %v286
    %582 = vmatprep.subr.mxu0 %v293
    %583 = vmatpush1.msra.mxu0 %v292
    %584 = vmatprep.subr.mxu0 %v299
    %585 = vmatpush1.msra.mxu0 %v298
    %586 = vmatprep.subr.mxu0 %v305
    %587 = vmatpush1.msra.mxu0 %v304
    %588 = vmatprep.subr.mxu0 %v311
    %589 = vmatpush1.msra.mxu0 %v310
    %590 = vmatprep.subr.mxu0 %v317
    %591 = vmatpush1.msra.mxu0 %v316
    %592 = vmatprep.subr.mxu0 %v323
    %593 = vmatpush1.msra.mxu0 %v322
    %594 = vmatprep.subr.mxu0 %v329
    %595 = vmatpush1.msra.mxu0 %v328
    %596 = vmatprep.subr.mxu0 %v335
    %597 = vmatpush1.msra.mxu0 %v334
    %598 = vmatprep.subr.mxu0 %v341
    %599 = vmatpush1.msra.mxu0 %v340
    %600 = vmatprep.subr.mxu0 %v347
    %601 = vmatpush1.msra.mxu0 %v346
    %602 = vmatprep.subr.mxu0 %v353
    %603 = vmatpush1.msra.mxu0 %v352
    %604 = vmatprep.mubr.f32.mxu0 %v63
    %605 = vmatmul.mubr.f32.gmra.mrb[0].mxu0 %v62
    %v606 = vpop.f32.mrb[0].mxu0
    %v607 = vadd.f32 %v375, %v606
    %v608 = vpop.f32.mrb[0].mxu0
    %v609 = vadd.f32 %v379, %v608
    %610 = vmatprep.mubr.f32.mxu0 %v65
    %611 = vmatmul.mubr.f32.gmra.mrb[0].mxu0 %v64
    %v612 = vpop.f32.mrb[0].mxu0
    %v613 = vadd.f32 %v375, %v612
    %v614 = vpop.f32.mrb[0].mxu0
    %v615 = vadd.f32 %v379, %v614
    %616 = vdwg.mxu0
    %617 = vmatprep.subr.mxu0 %v532
    %618 = vmatpush1.xpose.msra.mxu0 %v530
    %619 = vmatprep.subr.mxu0 0.0
    %620 = vmatpush1.xpose.msra.mxu0 0.0
    %621 = vmatprep.subr.mxu0 0.0
    %622 = vmatpush1.xpose.msra.mxu0 0.0
    %623 = vmatprep.subr.mxu0 0.0
    %624 = vmatpush1.xpose.msra.mxu0 0.0
    %625 = vmatprep.subr.mxu0 0.0
    %626 = vmatpush1.xpose.msra.mxu0 0.0
    %627 = vmatprep.subr.mxu0 0.0
    %628 = vmatpush1.xpose.msra.mxu0 0.0
    %629 = vmatprep.subr.mxu0 0.0
    %630 = vmatpush1.xpose.msra.mxu0 0.0
    %631 = vmatprep.subr.mxu0 0.0
    %632 = vmatpush1.xpose.msra.mxu0 0.0
    %633 = vmatprep.subr.mxu0 0.0
    %634 = vmatpush1.xpose.msra.mxu0 0.0
    %635 = vmatprep.subr.mxu0 0.0
    %636 = vmatpush1.xpose.msra.mxu0 0.0
    %637 = vmatprep.subr.mxu0 0.0
    %638 = vmatpush1.xpose.msra.mxu0 0.0
    %639 = vmatprep.subr.mxu0 0.0
    %640 = vmatpush1.xpose.msra.mxu0 0.0
    %641 = vmatprep.subr.mxu0 0.0
    %642 = vmatpush1.xpose.msra.mxu0 0.0
    %643 = vmatprep.subr.mxu0 0.0
    %644 = vmatpush1.xpose.msra.mxu0 0.0
    %645 = vmatprep.subr.mxu0 0.0
    %646 = vmatpush1.xpose.msra.mxu0 0.0
    %647 = vmatprep.subr.mxu0 0.0
    %648 = vmatpush1.xpose.msra.mxu0 0.0
    %649 = vmatprep.subr.mxu0 0.0
    %650 = vmatpush1.xpose.msra.mxu0 0.0
    %651 = vmatprep.subr.mxu0 0.0
    %652 = vmatpush1.xpose.msra.mxu0 0.0
    %653 = vmatprep.subr.mxu0 0.0
    %654 = vmatpush1.xpose.msra.mxu0 0.0
    %655 = vmatprep.subr.mxu0 0.0
    %656 = vmatpush1.xpose.msra.mxu0 0.0
    %657 = vmatprep.subr.mxu0 0.0
    %658 = vmatpush1.xpose.msra.mxu0 0.0
    %659 = vmatprep.subr.mxu0 0.0
    %660 = vmatpush1.xpose.msra.mxu0 0.0
    %661 = vmatprep.subr.mxu0 0.0
    %662 = vmatpush1.xpose.msra.mxu0 0.0
    %663 = vmatprep.subr.mxu0 0.0
    %664 = vmatpush1.xpose.msra.mxu0 0.0
    %665 = vmatprep.subr.mxu0 0.0
    %666 = vmatpush1.xpose.msra.mxu0 0.0
    %667 = vmatprep.subr.mxu0 0.0
    %668 = vmatpush1.xpose.msra.mxu0 0.0
    %669 = vmatprep.subr.mxu0 0.0
    %670 = vmatpush1.xpose.msra.mxu0 0.0
    %671 = vmatprep.subr.mxu0 0.0
    %672 = vmatpush1.xpose.msra.mxu0 0.0
    %673 = vmatprep.subr.mxu0 0.0
    %674 = vmatpush1.xpose.msra.mxu0 0.0
    %675 = vmatprep.subr.mxu0 0.0
    %676 = vmatpush1.xpose.msra.mxu0 0.0
    %677 = vmatprep.subr.mxu0 0.0
    %678 = vmatpush1.xpose.msra.mxu0 0.0
    %679 = vmatprep.subr.mxu0 0.0
    %680 = vmatpush1.xpose.msra.mxu0 0.0
    %681 = vmatprep.mubr.f32.mxu0 %v455
    %682 = vmatmul.mubr.f32.gmra.mrb[0].mxu0 %v453
    %v683 = vpop.f32.mrb[0].mxu0
    %v684 = vadd.f32 0.0, %v683
    %v685 = vpop.f32.mrb[0].mxu0
    %686 = vdwg.mxu0
    %687 = vmatprep.subr.mxu0 %v538
    %688 = vmatpush1.xpose.msra.mxu0 %v536
    %689 = vmatprep.subr.mxu0 0.0
    %690 = vmatpush1.xpose.msra.mxu0 0.0
    %691 = vmatprep.subr.mxu0 0.0
    %692 = vmatpush1.xpose.msra.mxu0 0.0
    %693 = vmatprep.subr.mxu0 0.0
    %694 = vmatpush1.xpose.msra.mxu0 0.0
    %695 = vmatprep.subr.mxu0 0.0
    %696 = vmatpush1.xpose.msra.mxu0 0.0
    %697 = vmatprep.subr.mxu0 0.0
    %698 = vmatpush1.xpose.msra.mxu0 0.0
    %699 = vmatprep.subr.mxu0 0.0
    %700 = vmatpush1.xpose.msra.mxu0 0.0
    %701 = vmatprep.subr.mxu0 0.0
    %702 = vmatpush1.xpose.msra.mxu0 0.0
    %703 = vmatprep.subr.mxu0 0.0
    %704 = vmatpush1.xpose.msra.mxu0 0.0
    %705 = vmatprep.subr.mxu0 0.0
    %706 = vmatpush1.xpose.msra.mxu0 0.0
    %707 = vmatprep.subr.mxu0 0.0
    %708 = vmatpush1.xpose.msra.mxu0 0.0
    %709 = vmatprep.subr.mxu0 0.0
    %710 = vmatpush1.xpose.msra.mxu0 0.0
    %711 = vmatprep.subr.mxu0 0.0
    %712 = vmatpush1.xpose.msra.mxu0 0.0
    %713 = vmatprep.subr.mxu0 0.0
    %714 = vmatpush1.xpose.msra.mxu0 0.0
    %715 = vmatprep.subr.mxu0 0.0
    %716 = vmatpush1.xpose.msra.mxu0 0.0
    %717 = vmatprep.subr.mxu0 0.0
    %718 = vmatpush1.xpose.msra.mxu0 0.0
    %719 = vmatprep.subr.mxu0 0.0
    %720 = vmatpush1.xpose.msra.mxu0 0.0
    %721 = vmatprep.subr.mxu0 0.0
    %722 = vmatpush1.xpose.msra.mxu0 0.0
    %723 = vmatprep.subr.mxu0 0.0
    %724 = vmatpush1.xpose.msra.mxu0 0.0
    %725 = vmatprep.subr.mxu0 0.0
    %726 = vmatpush1.xpose.msra.mxu0 0.0
    %727 = vmatprep.subr.mxu0 0.0
    %728 = vmatpush1.xpose.msra.mxu0 0.0
    %729 = vmatprep.subr.mxu0 0.0
    %730 = vmatpush1.xpose.msra.mxu0 0.0
    %731 = vmatprep.subr.mxu0 0.0
    %732 = vmatpush1.xpose.msra.mxu0 0.0
    %733 = vmatprep.subr.mxu0 0.0
    %734 = vmatpush1.xpose.msra.mxu0 0.0
    %735 = vmatprep.subr.mxu0 0.0
    %736 = vmatpush1.xpose.msra.mxu0 0.0
    %737 = vmatprep.subr.mxu0 0.0
    %738 = vmatpush1.xpose.msra.mxu0 0.0
    %739 = vmatprep.subr.mxu0 0.0
    %740 = vmatpush1.xpose.msra.mxu0 0.0
    %741 = vmatprep.subr.mxu0 0.0
    %742 = vmatpush1.xpose.msra.mxu0 0.0
    %743 = vmatprep.subr.mxu0 0.0
    %744 = vmatpush1.xpose.msra.mxu0 0.0
    %745 = vmatprep.subr.mxu0 0.0
    %746 = vmatpush1.xpose.msra.mxu0 0.0
    %747 = vmatprep.subr.mxu0 0.0
    %748 = vmatpush1.xpose.msra.mxu0 0.0
    %749 = vmatprep.subr.mxu0 0.0
    %750 = vmatpush1.xpose.msra.mxu0 0.0
    %751 = vmatprep.mubr.f32.mxu0 %v461
    %752 = vmatmul.mubr.f32.gmra.mrb[0].mxu0 %v459
    %v753 = vpop.f32.mrb[0].mxu0
    %v754 = vadd.f32 0.0, %v753
    %v755 = vpop.f32.mrb[0].mxu0
    %756 = vdwg.mxu0
    %vm757 = vcmask 64512
    %v758 = vsel %vm757, %v684, -inf
    %759 = vmax.xlane.f32.xlu0 %v758
    %v760 = vpop.xlane.xlu0 %759
    %v761 = vsel %vm757, %v754, -inf
    %762 = vmax.xlane.f32.xlu0 %v761
    %v763 = vpop.xlane.xlu0 %762
    %v764 = vsub.f32 %v684, %v760
    %v765 = vsub.f32 %v754, %v763
    %v766 = vmul.f32 %v764, 1.442695
    %v767 = vpow.pop %v766
    %v768 = vmul.f32 %v765, 1.442695
    %v769 = vpow.pop %v768
    %v770 = vsel %vm757, %v767, 0.0
    %771 = vadd.xlane.f32.xlu0 %v770
    %v772 = vpop.xlane.xlu0 %771
    %v773 = vsel %vm757, %v769, 0.0
    %774 = vadd.xlane.f32.xlu0 %v773
    %v775 = vpop.xlane.xlu0 %774
    %v776 = vrcp.pop %v772
    %v777 = vmul.f32 %v767, %v776
    %v778 = vrcp.pop %v775
    %v779 = vmul.f32 %v769, %v778
    %v781 = vsel %vm757, %v777, 0
    %783 = vmatprep.subr.mxu0 %v609
    %784 = vmatpush1.msra.mxu0 %v607
    %785 = vmatprep.subr.mxu0 0.0
    %786 = vmatpush1.msra.mxu0 0.0
    %787 = vmatprep.subr.mxu0 0.0
    %788 = vmatpush1.msra.mxu0 0.0
    %789 = vmatprep.subr.mxu0 0.0
    %790 = vmatpush1.msra.mxu0 0.0
    %791 = vmatprep.subr.mxu0 0.0
    %792 = vmatpush1.msra.mxu0 0.0
    %793 = vmatprep.subr.mxu0 0.0
    %794 = vmatpush1.msra.mxu0 0.0
    %795 = vmatprep.subr.mxu0 0.0
    %796 = vmatpush1.msra.mxu0 0.0
    %797 = vmatprep.subr.mxu0 0.0
    %798 = vmatpush1.msra.mxu0 0.0
    %799 = vmatprep.subr.mxu0 0.0
    %800 = vmatpush1.msra.mxu0 0.0
    %801 = vmatprep.subr.mxu0 0.0
    %802 = vmatpush1.msra.mxu0 0.0
    %803 = vmatprep.subr.mxu0 0.0
    %804 = vmatpush1.msra.mxu0 0.0
    %805 = vmatprep.subr.mxu0 0.0
    %806 = vmatpush1.msra.mxu0 0.0
    %807 = vmatprep.subr.mxu0 0.0
    %808 = vmatpush1.msra.mxu0 0.0
    %809 = vmatprep.subr.mxu0 0.0
    %810 = vmatpush1.msra.mxu0 0.0
    %811 = vmatprep.subr.mxu0 0.0
    %812 = vmatpush1.msra.mxu0 0.0
    %813 = vmatprep.subr.mxu0 0.0
    %814 = vmatpush1.msra.mxu0 0.0
    %815 = vmatprep.subr.mxu0 0.0
    %816 = vmatpush1.msra.mxu0 0.0
    %817 = vmatprep.subr.mxu0 0.0
    %818 = vmatpush1.msra.mxu0 0.0
    %819 = vmatprep.subr.mxu0 0.0
    %820 = vmatpush1.msra.mxu0 0.0
    %821 = vmatprep.subr.mxu0 0.0
    %822 = vmatpush1.msra.mxu0 0.0
    %823 = vmatprep.subr.mxu0 0.0
    %824 = vmatpush1.msra.mxu0 0.0
    %825 = vmatprep.subr.mxu0 0.0
    %826 = vmatpush1.msra.mxu0 0.0
    %827 = vmatprep.subr.mxu0 0.0
    %828 = vmatpush1.msra.mxu0 0.0
    %829 = vmatprep.subr.mxu0 0.0
    %830 = vmatpush1.msra.mxu0 0.0
    %831 = vmatprep.subr.mxu0 0.0
    %832 = vmatpush1.msra.mxu0 0.0
    %833 = vmatprep.subr.mxu0 0.0
    %834 = vmatpush1.msra.mxu0 0.0
    %835 = vmatprep.subr.mxu0 0.0
    %836 = vmatpush1.msra.mxu0 0.0
    %837 = vmatprep.subr.mxu0 0.0
    %838 = vmatpush1.msra.mxu0 0.0
    %839 = vmatprep.subr.mxu0 0.0
    %840 = vmatpush1.msra.mxu0 0.0
    %841 = vmatprep.subr.mxu0 0.0
    %842 = vmatpush1.msra.mxu0 0.0
    %843 = vmatprep.subr.mxu0 0.0
    %844 = vmatpush1.msra.mxu0 0.0
    %845 = vmatprep.subr.mxu0 0.0
    %846 = vmatpush1.msra.mxu0 0.0
    %847 = vmatprep.mubr.f32.mxu0 0.0
    %848 = vmatmul.mubr.f32.gmra.mrb[0].mxu0 %v781
    %v849 = vpop.f32.mrb[0].mxu0
    %v850 = vadd.f32 0.0, %v849
    %v851 = vpop.f32.mrb[0].mxu0
    %v852 = vadd.f32 0.0, %v851
    %853 = vdwg.mxu0
    %v855 = vsel %vm757, %v779, 0
    %857 = vmatprep.subr.mxu0 %v615
    %858 = vmatpush1.msra.mxu0 %v613
    %859 = vmatprep.subr.mxu0 0.0
    %860 = vmatpush1.msra.mxu0 0.0
    %861 = vmatprep.subr.mxu0 0.0
    %862 = vmatpush1.msra.mxu0 0.0
    %863 = vmatprep.subr.mxu0 0.0
    %864 = vmatpush1.msra.mxu0 0.0
    %865 = vmatprep.subr.mxu0 0.0
    %866 = vmatpush1.msra.mxu0 0.0
    %867 = vmatprep.subr.mxu0 0.0
    %868 = vmatpush1.msra.mxu0 0.0
    %869 = vmatprep.subr.mxu0 0.0
    %870 = vmatpush1.msra.mxu0 0.0
    %871 = vmatprep.subr.mxu0 0.0
    %872 = vmatpush1.msra.mxu0 0.0
    %873 = vmatprep.subr.mxu0 0.0
    %874 = vmatpush1.msra.mxu0 0.0
    %875 = vmatprep.subr.mxu0 0.0
    %876 = vmatpush1.msra.mxu0 0.0
    %877 = vmatprep.subr.mxu0 0.0
    %878 = vmatpush1.msra.mxu0 0.0
    %879 = vmatprep.subr.mxu0 0.0
    %880 = vmatpush1.msra.mxu0 0.0
    %881 = vmatprep.subr.mxu0 0.0
    %882 = vmatpush1.msra.mxu0 0.0
    %883 = vmatprep.subr.mxu0 0.0
    %884 = vmatpush1.msra.mxu0 0.0
    %885 = vmatprep.subr.mxu0 0.0
    %886 = vmatpush1.msra.mxu0 0.0
    %887 = vmatprep.subr.mxu0 0.0
    %888 = vmatpush1.msra.mxu0 0.0
    %889 = vmatprep.subr.mxu0 0.0
    %890 = vmatpush1.msra.mxu0 0.0
    %891 = vmatprep.subr.mxu0 0.0
    %892 = vmatpush1.msra.mxu0 0.0
    %893 = vmatprep.subr.mxu0 0.0
    %894 = vmatpush1.msra.mxu0 0.0
    %895 = vmatprep.subr.mxu0 0.0
    %896 = vmatpush1.msra.mxu0 0.0
    %897 = vmatprep.subr.mxu0 0.0
    %898 = vmatpush1.msra.mxu0 0.0
    %899 = vmatprep.subr.mxu0 0.0
    %900 = vmatpush1.msra.mxu0 0.0
    %901 = vmatprep.subr.mxu0 0.0
    %902 = vmatpush1.msra.mxu0 0.0
    %903 = vmatprep.subr.mxu0 0.0
    %904 = vmatpush1.msra.mxu0 0.0
    %905 = vmatprep.subr.mxu0 0.0
    %906 = vmatpush1.msra.mxu0 0.0
    %907 = vmatprep.subr.mxu0 0.0
    %908 = vmatpush1.msra.mxu0 0.0
    %909 = vmatprep.subr.mxu0 0.0
    %910 = vmatpush1.msra.mxu0 0.0
    %911 = vmatprep.subr.mxu0 0.0
    %912 = vmatpush1.msra.mxu0 0.0
    %913 = vmatprep.subr.mxu0 0.0
    %914 = vmatpush1.msra.mxu0 0.0
    %915 = vmatprep.subr.mxu0 0.0
    %916 = vmatpush1.msra.mxu0 0.0
    %917 = vmatprep.subr.mxu0 0.0
    %918 = vmatpush1.msra.mxu0 0.0
    %919 = vmatprep.subr.mxu0 0.0
    %920 = vmatpush1.msra.mxu0 0.0
    %921 = vmatprep.mubr.f32.mxu0 0.0
    %922 = vmatmul.mubr.f32.gmra.mrb[0].mxu0 %v855
    %v923 = vpop.f32.mrb[0].mxu0
    %v924 = vadd.f32 0.0, %v923
    %v925 = vpop.f32.mrb[0].mxu0
    %v926 = vadd.f32 0.0, %v925
    %927 = vdwg.mxu0
    %v928 = vld [vmem:[#allocation7] sm:$0xff]
    %v929 = vld [vmem:[#allocation7 + $0x8] sm:$0xff]
    %v930 = vld [vmem:[#allocation7 + $0x10] sm:$0xff]
    %v931 = vld [vmem:[#allocation7 + $0x18] sm:$0xff]
    %v932 = vld [vmem:[#allocation7 + $0x20] sm:$0xff]
    %v933 = vld [vmem:[#allocation7 + $0x28] sm:$0xff]
    %v934 = vld [vmem:[#allocation7 + $0x30] sm:$0xff]
    %v935 = vld [vmem:[#allocation7 + $0x38] sm:$0xff]
    %v936 = vld [vmem:[#allocation7 + $0x40] sm:$0xff]
    %v937 = vld [vmem:[#allocation7 + $0x48] sm:$0xff]
    %v938 = vld [vmem:[#allocation7 + $0x50] sm:$0xff]
    %v939 = vld [vmem:[#allocation7 + $0x58] sm:$0xff]
    %v940 = vld [vmem:[#allocation7 + $0x60] sm:$0xff]
    %v941 = vld [vmem:[#allocation7 + $0x68] sm:$0xff]
    %v942 = vld [vmem:[#allocation7 + $0x70] sm:$0xff]
    %v943 = vld [vmem:[#allocation7 + $0x78] sm:$0xff]
    %v944 = vld [vmem:[#allocation7 + $0x80] sm:$0xff]
    %v945 = vld [vmem:[#allocation7 + $0x88] sm:$0xff]
    %v946 = vld [vmem:[#allocation7 + $0x90] sm:$0xff]
    %v947 = vld [vmem:[#allocation7 + $0x98] sm:$0xff]
    %v948 = vld [vmem:[#allocation7 + $0xa0] sm:$0xff]
    %v949 = vld [vmem:[#allocation7 + $0xa8] sm:$0xff]
    %v950 = vld [vmem:[#allocation7 + $0xb0] sm:$0xff]
    %v951 = vld [vmem:[#allocation7 + $0xb8] sm:$0xff]
    %v952 = vld [vmem:[#allocation7 + $0xc0] sm:$0xff]
    %v953 = vld [vmem:[#allocation7 + $0xc8] sm:$0xff]
    %v954 = vld [vmem:[#allocation7 + $0xd0] sm:$0xff]
    %v955 = vld [vmem:[#allocation7 + $0xd8] sm:$0xff]
    %v956 = vld [vmem:[#allocation7 + $0xe0] sm:$0xff]
    %v957 = vld [vmem:[#allocation7 + $0xe8] sm:$0xff]
    %v958 = vld [vmem:[#allocation7 + $0xf0] sm:$0xff]
    %v959 = vld [vmem:[#allocation7 + $0xf8] sm:$0xff]
    %v960 = vunpack.c.l.bf16 %v928
    %v961 = vunpack.c.h.bf16 %v928
    %v962 = vunpack.c.l.bf16 %v929
    %v963 = vunpack.c.h.bf16 %v929
    %v964 = vunpack.c.l.bf16 %v930
    %v965 = vunpack.c.h.bf16 %v930
    %v966 = vunpack.c.l.bf16 %v931
    %v967 = vunpack.c.h.bf16 %v931
    %v968 = vunpack.c.l.bf16 %v932
    %v969 = vunpack.c.h.bf16 %v932
    %v970 = vunpack.c.l.bf16 %v933
    %v971 = vunpack.c.h.bf16 %v933
    %v972 = vunpack.c.l.bf16 %v934
    %v973 = vunpack.c.h.bf16 %v934
    %v974 = vunpack.c.l.bf16 %v935
    %v975 = vunpack.c.h.bf16 %v935
    %v976 = vunpack.c.l.bf16 %v936
    %v977 = vunpack.c.h.bf16 %v936
    %v978 = vunpack.c.l.bf16 %v937
    %v979 = vunpack.c.h.bf16 %v937
    %v980 = vunpack.c.l.bf16 %v938
    %v981 = vunpack.c.h.bf16 %v938
    %v982 = vunpack.c.l.bf16 %v939
    %v983 = vunpack.c.h.bf16 %v939
    %v984 = vunpack.c.l.bf16 %v940
    %v985 = vunpack.c.h.bf16 %v940
    %v986 = vunpack.c.l.bf16 %v941
    %v987 = vunpack.c.h.bf16 %v941
    %v988 = vunpack.c.l.bf16 %v942
    %v989 = vunpack.c.h.bf16 %v942
    %v990 = vunpack.c.l.bf16 %v943
    %v991 = vunpack.c.h.bf16 %v943
    %v992 = vunpack.c.l.bf16 %v944
    %v993 = vunpack.c.h.bf16 %v944
    %v994 = vunpack.c.l.bf16 %v945
    %v995 = vunpack.c.h.bf16 %v945
    %v996 = vunpack.c.l.bf16 %v946
    %v997 = vunpack.c.h.bf16 %v946
    %v998 = vunpack.c.l.bf16 %v947
    %v999 = vunpack.c.h.bf16 %v947
    %v1000 = vunpack.c.l.bf16 %v948
    %v1001 = vunpack.c.h.bf16 %v948
    %v1002 = vunpack.c.l.bf16 %v949
    %v1003 = vunpack.c.h.bf16 %v949
    %v1004 = vunpack.c.l.bf16 %v950
    %v1005 = vunpack.c.h.bf16 %v950
    %v1006 = vunpack.c.l.bf16 %v951
    %v1007 = vunpack.c.h.bf16 %v951
    %v1008 = vunpack.c.l.bf16 %v952
    %v1009 = vunpack.c.h.bf16 %v952
    %v1010 = vunpack.c.l.bf16 %v953
    %v1011 = vunpack.c.h.bf16 %v953
    %v1012 = vunpack.c.l.bf16 %v954
    %v1013 = vunpack.c.h.bf16 %v954
    %v1014 = vunpack.c.l.bf16 %v955
    %v1015 = vunpack.c.h.bf16 %v955
    %v1016 = vunpack.c.l.bf16 %v956
    %v1017 = vunpack.c.h.bf16 %v956
    %v1018 = vunpack.c.l.bf16 %v957
    %v1019 = vunpack.c.h.bf16 %v957
    %v1020 = vunpack.c.l.bf16 %v958
    %v1021 = vunpack.c.h.bf16 %v958
    %v1022 = vunpack.c.l.bf16 %v959
    %v1023 = vunpack.c.h.bf16 %v959
    %v1024 = vld [vmem:[%s4] sm:$0x3]
    %v1026 = vlaneseq
    %v1027 = vshrl.u32 %v1026, 7
    %v1028 = vsub.s32 0, %v1027
    %v1029 = vrot.slane %v1024, %v1028
    %v1030 = vlaneseq
    %v1031 = vshrl.u32 %v1030, 7
    %v1032 = vsub.s32 1, %v1031
    %v1033 = vrot.slane %v1024, %v1032
    %1036 = vmatprep.subr.mxu0 %v961
    %1037 = vmatpush1.msra.mxu0 %v960
    %1038 = vmatprep.subr.mxu0 %v963
    %1039 = vmatpush1.msra.mxu0 %v962
    %1040 = vmatprep.subr.mxu0 %v965
    %1041 = vmatpush1.msra.mxu0 %v964
    %1042 = vmatprep.subr.mxu0 %v967
    %1043 = vmatpush1.msra.mxu0 %v966
    %1044 = vmatprep.subr.mxu0 %v969
    %1045 = vmatpush1.msra.mxu0 %v968
    %1046 = vmatprep.subr.mxu0 %v971
    %1047 = vmatpush1.msra.mxu0 %v970
    %1048 = vmatprep.subr.mxu0 %v973
    %1049 = vmatpush1.msra.mxu0 %v972
    %1050 = vmatprep.subr.mxu0 %v975
    %1051 = vmatpush1.msra.mxu0 %v974
    %1052 = vmatprep.subr.mxu0 %v977
    %1053 = vmatpush1.msra.mxu0 %v976
    %1054 = vmatprep.subr.mxu0 %v979
    %1055 = vmatpush1.msra.mxu0 %v978
    %1056 = vmatprep.subr.mxu0 %v981
    %1057 = vmatpush1.msra.mxu0 %v980
    %1058 = vmatprep.subr.mxu0 %v983
    %1059 = vmatpush1.msra.mxu0 %v982
    %1060 = vmatprep.subr.mxu0 %v985
    %1061 = vmatpush1.msra.mxu0 %v984
    %1062 = vmatprep.subr.mxu0 %v987
    %1063 = vmatpush1.msra.mxu0 %v986
    %1064 = vmatprep.subr.mxu0 %v989
    %1065 = vmatpush1.msra.mxu0 %v988
    %1066 = vmatprep.subr.mxu0 %v991
    %1067 = vmatpush1.msra.mxu0 %v990
    %1068 = vmatprep.subr.mxu0 %v993
    %1069 = vmatpush1.msra.mxu0 %v992
    %1070 = vmatprep.subr.mxu0 %v995
    %1071 = vmatpush1.msra.mxu0 %v994
    %1072 = vmatprep.subr.mxu0 %v997
    %1073 = vmatpush1.msra.mxu0 %v996
    %1074 = vmatprep.subr.mxu0 %v999
    %1075 = vmatpush1.msra.mxu0 %v998
    %1076 = vmatprep.subr.mxu0 %v1001
    %1077 = vmatpush1.msra.mxu0 %v1000
    %1078 = vmatprep.subr.mxu0 %v1003
    %1079 = vmatpush1.msra.mxu0 %v1002
    %1080 = vmatprep.subr.mxu0 %v1005
    %1081 = vmatpush1.msra.mxu0 %v1004
    %1082 = vmatprep.subr.mxu0 %v1007
    %1083 = vmatpush1.msra.mxu0 %v1006
    %1084 = vmatprep.subr.mxu0 %v1009
    %1085 = vmatpush1.msra.mxu0 %v1008
    %1086 = vmatprep.subr.mxu0 %v1011
    %1087 = vmatpush1.msra.mxu0 %v1010
    %1088 = vmatprep.subr.mxu0 %v1013
    %1089 = vmatpush1.msra.mxu0 %v1012
    %1090 = vmatprep.subr.mxu0 %v1015
    %1091 = vmatpush1.msra.mxu0 %v1014
    %1092 = vmatprep.subr.mxu0 %v1017
    %1093 = vmatpush1.msra.mxu0 %v1016
    %1094 = vmatprep.subr.mxu0 %v1019
    %1095 = vmatpush1.msra.mxu0 %v1018
    %1096 = vmatprep.subr.mxu0 %v1021
    %1097 = vmatpush1.msra.mxu0 %v1020
    %1098 = vmatprep.subr.mxu0 %v1023
    %1099 = vmatpush1.msra.mxu0 %v1022
    %1100 = vmatprep.mubr.f32.mxu0 %v852
    %1101 = vmatmul.mubr.f32.gmra.mrb[0].mxu0 %v850
    %v1102 = vpop.f32.mrb[0].mxu0
    %v1103 = vadd.f32 %v1029, %v1102
    %v1104 = vpop.f32.mrb[0].mxu0
    %v1105 = vadd.f32 %v1033, %v1104
    %1106 = vmatprep.mubr.f32.mxu0 %v926
    %1107 = vmatmul.mubr.f32.gmra.mrb[0].mxu0 %v924
    %v1108 = vpop.f32.mrb[0].mxu0
    %v1109 = vadd.f32 %v1029, %v1108
    %v1110 = vpop.f32.mrb[0].mxu0
    %v1111 = vadd.f32 %v1033, %v1110
    %1112 = vdwg.mxu0
    %1113 = vst [vmem:[#allocation8] sm:$0xff] %v1103
    %1114 = vst [vmem:[#allocation8 + $0x8] sm:$0xff] %v1105
    %1115 = vst [vmem:[#allocation8 + $0x10] sm:$0xff] %v1109
    %1116 = vst [vmem:[#allocation8 + $0x18] sm:$0xff] %v1111
    // Predicated region
    $region34: #{tpu_custom_call.1} parent=1 // pred_check
      _
    $region35: #{tpu_custom_call.1} parent=1 // pred_check_branch
      %1118 = sbr.rel (0) target = $region37
    $region36: #{tpu_custom_call.1} parent=1 // pred_region
      %s1120 = ssub.s32 512, 512
      %1121 = vsyncadd [#allocation4], %s1120
      %s1122 = sshll.u32 [#allocation8], 4
      %s1123 = int_to_ptr.vmem [resolvable:$true] %s1122
      %1128 = dma.vmem_to_hbm [thread:$0]  %s1123, 512, %s5, [#allocation4], 256, 256, 16
    $region37: #{tpu_custom_call.1} parent=1 // pred_fallthru
      _
    // Predicated region
    $region38: #{tpu_custom_call.1} parent=1 // pred_check
      _
    $region39: #{tpu_custom_call.1} parent=1 // pred_check_branch
      %1130 = sbr.rel (0) target = $region41
    $region40: #{tpu_custom_call.1} parent=1 // pred_region
      %1131 = dma.done [#allocation4], 512
    $region41: #{tpu_custom_call.1} parent=1 // pred_fallthru
      _
    %1132 = vsyncpa [#allocation3], 1
    %1133 = vsyncpa [#allocation6], 1
    %1134 = vsyncpa [#allocation4], 1

</llo_original>
